<compile_context>
chip_gen: v7x
topology: tpu7x:2x2x1
jax: 0.10.0
libtpu: 0.0.40
codegen_flags: <defaults>
</compile_context>

<pallas_src>
import jax
import jax.numpy as jnp
from jax.experimental import pallas as pl
from jax.experimental.pallas import tpu as pltpu

INPUT_SIZE = 112
HIDDEN_SIZE = 64
LANE = 128  # lane-dense padded width for the hidden dim


def _round_up(n, m):
    return (n + m - 1) // m * m


def _encoder_kernel(x_ref, w1t_ref, b1_ref, w2t_ref, b2_ref, o_ref):
    # fc1 on the MXU: bf16 operands, f32 accumulation.
    x = x_ref[...].astype(jnp.bfloat16)
    h = jnp.dot(x, w1t_ref[...], preferred_element_type=jnp.float32)
    h = jnp.maximum(h + b1_ref[...], 0.0)  # bias + ReLU in f32 on the VPU
    # dropout(p=0.1): identity in eval mode.
    # TODO(synk): training-mode dropout (pltpu.prng_random_bits mask) not implemented.
    y = jnp.dot(h.astype(jnp.bfloat16), w2t_ref[...],
                preferred_element_type=jnp.float32)
    o_ref[...] = (y + b2_ref[...]).astype(o_ref.dtype)


def prepare_params(w1, b1, w2, b2):
    """One-time layout prep (hoisted out of the forward path).

    w1: (hidden, input), b1: (hidden,), w2: (hidden, hidden), b2: (hidden,)
    Returns pre-transposed bf16 weights with the hidden (output) dim zero-padded
    to 128 lanes, plus f32 biases padded the same way.  Zero padding keeps the
    padded math exactly equal to the unpadded math.
    """
    hid, in_dim = w1.shape
    hid_pad = _round_up(hid, LANE)

    w1t = jnp.zeros((in_dim, hid_pad), jnp.float32)
    w1t = w1t.at[:, :hid].set(jnp.asarray(w1, jnp.float32).T)
    w2t = jnp.zeros((hid_pad, hid_pad), jnp.float32)
    w2t = w2t.at[:hid, :hid].set(jnp.asarray(w2, jnp.float32).T)
    b1r = jnp.zeros((1, hid_pad), jnp.float32)
    b1r = b1r.at[:, :hid].set(jnp.asarray(b1, jnp.float32)[None, :])
    b2r = jnp.zeros((1, hid_pad), jnp.float32)
    b2r = b2r.at[:, :hid].set(jnp.asarray(b2, jnp.float32)[None, :])

    return dict(
        w1t=w1t.astype(jnp.bfloat16),
        w2t=w2t.astype(jnp.bfloat16),
        b1=b1r,
        b2=b2r,
        in_dim=in_dim,
        hid=hid,
        hid_pad=hid_pad,
    )


def simple_encoder(x, params, *, tile_b=512):
    """x: (B, input_size) float32. Returns (B, hidden) float32. Eval-mode forward."""
    B, in_dim = x.shape
    assert in_dim == params["in_dim"]
    hid, hid_pad = params["hid"], params["hid_pad"]
    x = jnp.asarray(x, jnp.float32)

    weight_args = (params["w1t"], params["b1"], params["w2t"], params["b2"])
    cparams = pltpu.CompilerParams(vmem_limit_bytes=32 * 1024 * 1024)

    if B <= tile_b:
        # Tiny batch: grid-less single shot (skips per-step pipeline overhead).
        out = pl.pallas_call(
            _encoder_kernel,
            out_shape=jax.ShapeDtypeStruct((B, hid_pad), jnp.float32),
            compiler_params=cparams,
        )(x, *weight_args)
    else:
        # Batch-tiled, pipelined path; weights/biases stay VMEM-resident
        # (their index_map always returns block (0, 0)).
        n_tiles = pl.cdiv(B, tile_b)
        b_pad = n_tiles * tile_b
        xp = jnp.pad(x, ((0, b_pad - B), (0, 0)))
        out = pl.pallas_call(
            _encoder_kernel,
            out_shape=jax.ShapeDtypeStruct((b_pad, hid_pad), jnp.float32),
            grid=(n_tiles,),
            in_specs=[
                pl.BlockSpec((tile_b, in_dim), lambda i: (i, 0)),
                pl.BlockSpec((in_dim, hid_pad), lambda i: (0, 0)),
                pl.BlockSpec((1, hid_pad), lambda i: (0, 0)),
                pl.BlockSpec((hid_pad, hid_pad), lambda i: (0, 0)),
                pl.BlockSpec((1, hid_pad), lambda i: (0, 0)),
            ],
            out_specs=pl.BlockSpec((tile_b, hid_pad), lambda i: (i, 0)),
            compiler_params=pltpu.CompilerParams(
                dimension_semantics=("parallel",),  # megacore / dual-TC sharding
                vmem_limit_bytes=32 * 1024 * 1024),
        )(xp, *weight_args)
        out = out[:B]

    # Slice away the lane padding of the hidden dim.
    return out[:, :hid]


def _init_params(key, input_size, hidden_size):
    # Deterministic synthetic init (uniform, like PyTorch's Linear default range).
    k1, k2, k3, k4 = jax.random.split(key, 4)
    bound1 = 1.0 / (input_size ** 0.5)
    bound2 = 1.0 / (hidden_size ** 0.5)
    w1 = jax.random.uniform(k1, (hidden_size, input_size), jnp.float32, -bound1, bound1)
    b1 = jax.random.uniform(k2, (hidden_size,), jnp.float32, -bound1, bound1)
    w2 = jax.random.uniform(k3, (hidden_size, hidden_size), jnp.float32, -bound2, bound2)
    b2 = jax.random.uniform(k4, (hidden_size,), jnp.float32, -bound2, bound2)
    return w1, b1, w2, b2


if __name__ == "__main__":
    key = jax.random.PRNGKey(0)
    kx, kp, kx2 = jax.random.split(key, 3)

    w1, b1, w2, b2 = _init_params(kp, INPUT_SIZE, HIDDEN_SIZE)
    params = prepare_params(w1, b1, w2, b2)

    def ref_fwd(x):
        # Reference with the same bf16 operand rounding as the MXU, f32 accumulation.
        f = lambda a: a.astype(jnp.bfloat16).astype(jnp.float32)
        h = jnp.maximum(f(x) @ f(w1).T + b1, 0.0)
        return f(h) @ f(w2).T + b2

    # Small batch -> grid-less single-shot path.
    x = jax.random.normal(kx, (8, INPUT_SIZE), jnp.float32)
    out = jax.block_until_ready(simple_encoder(x, params))
    assert out.shape == (8, HIDDEN_SIZE)
    assert jnp.allclose(out, ref_fwd(x), atol=3e-3, rtol=3e-3)

    # Larger ragged batch -> batch-tiled, parallel-grid path.
    x2 = jax.random.normal(kx2, (1000, INPUT_SIZE), jnp.float32)
    out2 = jax.block_until_ready(simple_encoder(x2, params, tile_b=256))
    assert out2.shape == (1000, HIDDEN_SIZE)
    assert jnp.allclose(out2, ref_fwd(x2), atol=3e-3, rtol=3e-3)

    print("KERNEL_OK")
</pallas_src>

<mosaic_0001>
module attributes {stable_mosaic.version = 11 : i64} {
  func.func @_encoder_kernel(%arg0: memref<8x112xf32, #tpu.memory_space<vmem>>, %arg1: memref<112x128xbf16, #tpu.memory_space<vmem>>, %arg2: memref<1x128xf32, #tpu.memory_space<vmem>>, %arg3: memref<128x128xbf16, #tpu.memory_space<vmem>>, %arg4: memref<1x128xf32, #tpu.memory_space<vmem>>, %arg5: memref<8x128xf32, #tpu.memory_space<vmem>>) attributes {dimension_semantics = [], scalar_prefetch = 0 : i64, scratch_operands = 0 : i64, tpu.core_type = #tpu.core_type<tc>} {
    %c0 = arith.constant 0 : index
    %c0_0 = arith.constant 0 : index
    %0 = vector.load %arg0[%c0, %c0_0] : memref<8x112xf32, #tpu.memory_space<vmem>>, vector<8x112xf32>
    %1 = arith.truncf %0 : vector<8x112xf32> to vector<8x112xbf16>
    %c0_1 = arith.constant 0 : index
    %c0_2 = arith.constant 0 : index
    %2 = vector.load %arg1[%c0_1, %c0_2] : memref<112x128xbf16, #tpu.memory_space<vmem>>, vector<112x128xbf16>
    %cst = arith.constant dense<0.000000e+00> : vector<8x128xf32>
    %3 = tpu.matmul %1, %2, %cst {dimension_numbers = #tpu.dot_dimension_numbers<[1], [0], [0], [1], [0, 0, 1, 1], [], []>} : vector<8x112xbf16>, vector<112x128xbf16>, vector<8x128xf32> -> vector<8x128xf32>
    %c0_3 = arith.constant 0 : index
    %c0_4 = arith.constant 0 : index
    %4 = vector.load %arg2[%c0_3, %c0_4] : memref<1x128xf32, #tpu.memory_space<vmem>>, vector<1x128xf32>
    %5 = vector.broadcast %4 : vector<1x128xf32> to vector<8x128xf32>
    %6 = arith.addf %3, %5 : vector<8x128xf32>
    %cst_5 = arith.constant 0.000000e+00 : f32
    %7 = vector.broadcast %cst_5 : f32 to vector<8x128xf32>
    %8 = arith.maximumf %6, %7 : vector<8x128xf32>
    %9 = arith.truncf %8 : vector<8x128xf32> to vector<8x128xbf16>
    %c0_6 = arith.constant 0 : index
    %c0_7 = arith.constant 0 : index
    %10 = vector.load %arg3[%c0_6, %c0_7] : memref<128x128xbf16, #tpu.memory_space<vmem>>, vector<128x128xbf16>
    %cst_8 = arith.constant dense<0.000000e+00> : vector<8x128xf32>
    %11 = tpu.matmul %9, %10, %cst_8 {dimension_numbers = #tpu.dot_dimension_numbers<[1], [0], [0], [1], [0, 0, 1, 1], [], []>} : vector<8x128xbf16>, vector<128x128xbf16>, vector<8x128xf32> -> vector<8x128xf32>
    %c0_9 = arith.constant 0 : index
    %c0_10 = arith.constant 0 : index
    %12 = vector.load %arg4[%c0_9, %c0_10] : memref<1x128xf32, #tpu.memory_space<vmem>>, vector<1x128xf32>
    %13 = vector.broadcast %12 : vector<1x128xf32> to vector<8x128xf32>
    %14 = arith.addf %11, %13 : vector<8x128xf32>
    %c0_11 = arith.constant 0 : index
    %c0_12 = arith.constant 0 : index
    %15 = vector.load %arg5[%c0_11, %c0_12] : memref<8x128xf32, #tpu.memory_space<vmem>>, vector<8x128xf32>
    tpu.vector_store %arg5[%c0_11, %c0_12], %14 {strides = array<i32>} : memref<8x128xf32, #tpu.memory_space<vmem>>, vector<8x128xf32>,
    return
  }
}

</mosaic_0001>

<llo_original>
// kernel: tpu_custom_call.1
$region0: #{tpu_custom_call.1}
  #allocation0 [shape = 'u32[]', space=smem, size = 0x4, offset = 0x4, fixed_abs, tag = 'smem constant byte address 0x4 - core index']
  #allocation1 [shape = 'u32[144,128]{1,0:T(1,128)}', space=vmem, size = 0x12000, scoped, tag = 'internal scratch']
  %s0 = inlined_call_operand.hbm [shape: f32[8,112], index: 0, kind: input, shape index: {}]
  %s1 = inlined_call_operand.hbm [shape: bf16[112,128], index: 1, kind: input, shape index: {}]
  %s2 = inlined_call_operand.vmem [shape: f32[1,128], index: 2, kind: input, shape index: {}]
  %s3 = inlined_call_operand.hbm [shape: bf16[128,128], index: 3, kind: input, shape index: {}]
  %s4 = inlined_call_operand.vmem [shape: f32[1,128], index: 4, kind: input, shape index: {}]
  %s5 = inlined_call_operand.hbm [shape: f32[8,128], index: 5, kind: output, shape index: {}]
  %s6 = sld [smem:[#allocation0]]
  $region42: #{tpu_custom_call.1} parent=0
    _
  %s8 = ssub.s32 1, %s6
  %s9 = scalar_select 0, %s8, %s6
  $region1: #{tpu_custom_call.1} parent=0
    #allocation2 [shape = 'u8[4096]{0}', space=vmem, size = 0x1000, scoped, tag = 'input window, operand 0, single buffered']
    #allocation3 [shape = 's32[1]{0}', space=sflag, size = 0x4, scoped, tag = 'scoped memory for tpu_custom_call.1']
    #allocation4 [shape = 's32[1]{0}', space=sflag, size = 0x4, scoped, tag = 'scoped memory for tpu_custom_call.1']
    #allocation5 [shape = 'u8[28672]{0}', space=vmem, size = 0x7000, scoped, tag = 'input window, operand 1, single buffered']
    #allocation6 [shape = 's32[1]{0}', space=sflag, size = 0x4, scoped, tag = 'scoped memory for tpu_custom_call.1']
    #allocation7 [shape = 'u8[32768]{0}', space=vmem, size = 0x8000, scoped, tag = 'input window, operand 3, single buffered']
    #allocation8 [shape = 'u8[4096]{0}', space=vmem, size = 0x1000, scoped, tag = 'output window, operand 0, single buffered']
    %10 = vsyncpa [#allocation3], 0
    %11 = vsyncpa [#allocation6], 0
    %12 = vsyncpa [#allocation4], 0
    // Predicated region
    $region2: #{tpu_custom_call.1} parent=1 // pred_check
      _
    $region3: #{tpu_custom_call.1} parent=1 // pred_check_branch
      %14 = sbr.rel (0) target = $region5
    $region4: #{tpu_custom_call.1} parent=1 // pred_region
      %s16 = ssub.s32 128, 128
      %17 = vsyncadd [#allocation3], %s16
      %s19 = sshll.u32 [#allocation2], 4
      %s20 = int_to_ptr.vmem [resolvable:$true] %s19
      %22 = dma.hbm_to_vmem [thread:$0]  %s0, 128, %s20, [#allocation3]
    $region5: #{tpu_custom_call.1} parent=1 // pred_fallthru
      _
    // Predicated region
    $region6: #{tpu_custom_call.1} parent=1 // pred_check
      _
    $region7: #{tpu_custom_call.1} parent=1 // pred_check_branch
      %24 = sbr.rel (0) target = $region9
    $region8: #{tpu_custom_call.1} parent=1 // pred_region
      %s26 = ssub.s32 896, 896
      %27 = vsyncadd [#allocation6], %s26
      %s28 = sshll.u32 [#allocation5], 4
      %s29 = int_to_ptr.vmem [resolvable:$true] %s28
      %34 = dma.hbm_to_vmem [thread:$0]  %s1, 896, %s29, [#allocation6], 64, 64, 4
    $region9: #{tpu_custom_call.1} parent=1 // pred_fallthru
      _
    // Predicated region
    $region10: #{tpu_custom_call.1} parent=1 // pred_check
      _
    $region11: #{tpu_custom_call.1} parent=1 // pred_check_branch
      %36 = sbr.rel (0) target = $region13
    $region12: #{tpu_custom_call.1} parent=1 // pred_region
      _
    $region13: #{tpu_custom_call.1} parent=1 // pred_fallthru
      _
    // Predicated region
    $region14: #{tpu_custom_call.1} parent=1 // pred_check
      _
    $region15: #{tpu_custom_call.1} parent=1 // pred_check_branch
      %38 = sbr.rel (0) target = $region17
    $region16: #{tpu_custom_call.1} parent=1 // pred_region
      %s40 = ssub.s32 1024, 1024
      %41 = vsyncadd [#allocation6], %s40
      %s42 = sshll.u32 [#allocation7], 4
      %s43 = int_to_ptr.vmem [resolvable:$true] %s42
      %48 = dma.hbm_to_vmem [thread:$0]  %s3, 1024, %s43, [#allocation6], 64, 64, 4
    $region17: #{tpu_custom_call.1} parent=1 // pred_fallthru
      _
    // Predicated region
    $region18: #{tpu_custom_call.1} parent=1 // pred_check
      _
    $region19: #{tpu_custom_call.1} parent=1 // pred_check_branch
      %50 = sbr.rel (0) target = $region21
    $region20: #{tpu_custom_call.1} parent=1 // pred_region
      _
    $region21: #{tpu_custom_call.1} parent=1 // pred_fallthru
      _
    // Predicated region
    $region22: #{tpu_custom_call.1} parent=1 // pred_check
      _
    $region23: #{tpu_custom_call.1} parent=1 // pred_check_branch
      %52 = sbr.rel (0) target = $region25
    $region24: #{tpu_custom_call.1} parent=1 // pred_region
      %53 = dma.done [#allocation3], 128
    $region25: #{tpu_custom_call.1} parent=1 // pred_fallthru
      _
    // Predicated region
    $region26: #{tpu_custom_call.1} parent=1 // pred_check
      _
    $region27: #{tpu_custom_call.1} parent=1 // pred_check_branch
      %55 = sbr.rel (0) target = $region29
    $region28: #{tpu_custom_call.1} parent=1 // pred_region
      %56 = dma.done [#allocation6], 896
    $region29: #{tpu_custom_call.1} parent=1 // pred_fallthru
      _
    // Predicated region
    $region30: #{tpu_custom_call.1} parent=1 // pred_check
      _
    $region31: #{tpu_custom_call.1} parent=1 // pred_check_branch
      %58 = sbr.rel (0) target = $region33
    $region32: #{tpu_custom_call.1} parent=1 // pred_region
      %59 = dma.done [#allocation6], 1024
    $region33: #{tpu_custom_call.1} parent=1 // pred_fallthru
      _
    %v61 = vld [vmem:[#allocation2] sm:$0xff]
    %v62 = vpack.c.bf16 %v61, %v61
    %v63 = vld [vmem:[#allocation5] sm:$0xf]
    %v64 = vld [vmem:[#allocation5 + $0x4] sm:$0xf]
    %v65 = vld [vmem:[#allocation5 + $0x8] sm:$0xf]
    %v66 = vld [vmem:[#allocation5 + $0xc] sm:$0xf]
    %v67 = vld [vmem:[#allocation5 + $0x10] sm:$0xf]
    %v68 = vld [vmem:[#allocation5 + $0x14] sm:$0xf]
    %v69 = vld [vmem:[#allocation5 + $0x18] sm:$0xf]
    %v70 = vld [vmem:[#allocation5 + $0x1c] sm:$0xf]
    %v71 = vld [vmem:[#allocation5 + $0x20] sm:$0xf]
    %v72 = vld [vmem:[#allocation5 + $0x24] sm:$0xf]
    %v73 = vld [vmem:[#allocation5 + $0x28] sm:$0xf]
    %v74 = vld [vmem:[#allocation5 + $0x2c] sm:$0xf]
    %v75 = vld [vmem:[#allocation5 + $0x30] sm:$0xf]
    %v76 = vld [vmem:[#allocation5 + $0x34] sm:$0xf]
    %v77 = vld [vmem:[%s2] sm:$0x1]
    %v79 = vlaneseq
    %v80 = vshrl.u32 %v79, 7
    %v81 = vsub.s32 0, %v80
    %v82 = vrot.slane %v77, %v81
    %v98 = vunpack.c.l.b16 %v63
    %v99 = vunpack.c.l.b16 %v64
    %v100 = vunpack.c.l.b16 %v65
    %v101 = vunpack.c.l.b16 %v66
    %v102 = vunpack.c.l.b16 %v67
    %v103 = vunpack.c.l.b16 %v68
    %v104 = vunpack.c.l.b16 %v69
    %v105 = vunpack.c.l.b16 %v70
    %v106 = vunpack.c.l.b16 %v71
    %v107 = vunpack.c.l.b16 %v72
    %v108 = vunpack.c.l.b16 %v73
    %v109 = vunpack.c.l.b16 %v74
    %v110 = vunpack.c.l.b16 %v75
    %v111 = vunpack.c.l.b16 %v76
    %v112 = vpack.c.b16 %v99, %v98
    %v113 = vpack.c.b16 %v101, %v100
    %v114 = vpack.c.b16 %v103, %v102
    %v115 = vpack.c.b16 %v105, %v104
    %v116 = vpack.c.b16 %v107, %v106
    %v117 = vpack.c.b16 %v109, %v108
    %v118 = vpack.c.b16 %v111, %v110
    %vm126 = vcmask 916480
    %v128 = vsel %vm126, %v62, 0
    %130 = vmatprep.subr.bf16.mxu0 0
    %131 = vmatpush1.bf16.msra.mxu0 %v112
    %132 = vmatprep.subr.bf16.mxu0 0
    %133 = vmatpush1.bf16.msra.mxu0 %v113
    %134 = vmatprep.subr.bf16.mxu0 0
    %135 = vmatpush1.bf16.msra.mxu0 %v114
    %136 = vmatprep.subr.bf16.mxu0 0
    %137 = vmatpush1.bf16.msra.mxu0 %v115
    %138 = vmatprep.subr.bf16.mxu0 0
    %139 = vmatpush1.bf16.msra.mxu0 %v116
    %140 = vmatprep.subr.bf16.mxu0 0
    %141 = vmatpush1.bf16.msra.mxu0 %v117
    %142 = vmatprep.subr.bf16.mxu0 0
    %143 = vmatpush1.bf16.msra.mxu0 %v118
    %144 = vmatprep.subr.bf16.mxu0 0
    %145 = vmatpush1.bf16.msra.mxu0 0
    %146 = vmatprep.subr.bf16.mxu0 0
    %147 = vmatpush1.bf16.msra.mxu0 0
    %148 = vmatprep.subr.bf16.mxu0 0
    %149 = vmatpush1.bf16.msra.mxu0 0
    %150 = vmatprep.subr.bf16.mxu0 0
    %151 = vmatpush1.bf16.msra.mxu0 0
    %152 = vmatprep.subr.bf16.mxu0 0
    %153 = vmatpush1.bf16.msra.mxu0 0
    %154 = vmatprep.subr.bf16.mxu0 0
    %155 = vmatpush1.bf16.msra.mxu0 0
    %156 = vmatprep.subr.bf16.mxu0 0
    %157 = vmatpush1.bf16.msra.mxu0 0
    %158 = vmatprep.subr.bf16.mxu0 0
    %159 = vmatpush1.bf16.msra.mxu0 0
    %160 = vmatprep.subr.bf16.mxu0 0
    %161 = vmatpush1.bf16.msra.mxu0 0
    %162 = vmatprep.mubr.bf16.mxu0 0
    %163 = vmatmul.mubr.bf16.gmra.mrb[0].mxu0 %v128
    %v164 = vpop.f32.mrb[0].mxu0
    %v165 = vadd.f32 %v82, %v164
    %v166 = vpop.f32.mrb[0].mxu0
    %v167 = vpop.f32.mrb[0].mxu0
    %v168 = vpop.f32.mrb[0].mxu0
    %169 = vdwg.mxu0
    %v170 = vmax.f32 %v165, 0.0
    %v171 = vpack.c.bf16 %v170, %v170
    %v172 = vld [vmem:[#allocation7] sm:$0xf]
    %v173 = vld [vmem:[#allocation7 + $0x4] sm:$0xf]
    %v174 = vld [vmem:[#allocation7 + $0x8] sm:$0xf]
    %v175 = vld [vmem:[#allocation7 + $0xc] sm:$0xf]
    %v176 = vld [vmem:[#allocation7 + $0x10] sm:$0xf]
    %v177 = vld [vmem:[#allocation7 + $0x14] sm:$0xf]
    %v178 = vld [vmem:[#allocation7 + $0x18] sm:$0xf]
    %v179 = vld [vmem:[#allocation7 + $0x1c] sm:$0xf]
    %v180 = vld [vmem:[#allocation7 + $0x20] sm:$0xf]
    %v181 = vld [vmem:[#allocation7 + $0x24] sm:$0xf]
    %v182 = vld [vmem:[#allocation7 + $0x28] sm:$0xf]
    %v183 = vld [vmem:[#allocation7 + $0x2c] sm:$0xf]
    %v184 = vld [vmem:[#allocation7 + $0x30] sm:$0xf]
    %v185 = vld [vmem:[#allocation7 + $0x34] sm:$0xf]
    %v186 = vld [vmem:[#allocation7 + $0x38] sm:$0xf]
    %v187 = vld [vmem:[#allocation7 + $0x3c] sm:$0xf]
    %v188 = vld [vmem:[%s4] sm:$0x1]
    %v190 = vlaneseq
    %v191 = vshrl.u32 %v190, 7
    %v192 = vsub.s32 0, %v191
    %v193 = vrot.slane %v188, %v192
    %v211 = vunpack.c.l.b16 %v172
    %v212 = vunpack.c.l.b16 %v173
    %v213 = vunpack.c.l.b16 %v174
    %v214 = vunpack.c.l.b16 %v175
    %v215 = vunpack.c.l.b16 %v176
    %v216 = vunpack.c.l.b16 %v177
    %v217 = vunpack.c.l.b16 %v178
    %v218 = vunpack.c.l.b16 %v179
    %v219 = vunpack.c.l.b16 %v180
    %v220 = vunpack.c.l.b16 %v181
    %v221 = vunpack.c.l.b16 %v182
    %v222 = vunpack.c.l.b16 %v183
    %v223 = vunpack.c.l.b16 %v184
    %v224 = vunpack.c.l.b16 %v185
    %v225 = vunpack.c.l.b16 %v186
    %v226 = vunpack.c.l.b16 %v187
    %v227 = vpack.c.b16 %v212, %v211
    %v228 = vpack.c.b16 %v214, %v213
    %v229 = vpack.c.b16 %v216, %v215
    %v230 = vpack.c.b16 %v218, %v217
    %v231 = vpack.c.b16 %v220, %v219
    %v232 = vpack.c.b16 %v222, %v221
    %v233 = vpack.c.b16 %v224, %v223
    %v234 = vpack.c.b16 %v226, %v225
    %243 = vmatprep.subr.bf16.mxu0 0
    %244 = vmatpush1.bf16.msra.mxu0 %v227
    %245 = vmatprep.subr.bf16.mxu0 0
    %246 = vmatpush1.bf16.msra.mxu0 %v228
    %247 = vmatprep.subr.bf16.mxu0 0
    %248 = vmatpush1.bf16.msra.mxu0 %v229
    %249 = vmatprep.subr.bf16.mxu0 0
    %250 = vmatpush1.bf16.msra.mxu0 %v230
    %251 = vmatprep.subr.bf16.mxu0 0
    %252 = vmatpush1.bf16.msra.mxu0 %v231
    %253 = vmatprep.subr.bf16.mxu0 0
    %254 = vmatpush1.bf16.msra.mxu0 %v232
    %255 = vmatprep.subr.bf16.mxu0 0
    %256 = vmatpush1.bf16.msra.mxu0 %v233
    %257 = vmatprep.subr.bf16.mxu0 0
    %258 = vmatpush1.bf16.msra.mxu0 %v234
    %259 = vmatprep.subr.bf16.mxu0 0
    %260 = vmatpush1.bf16.msra.mxu0 0
    %261 = vmatprep.subr.bf16.mxu0 0
    %262 = vmatpush1.bf16.msra.mxu0 0
    %263 = vmatprep.subr.bf16.mxu0 0
    %264 = vmatpush1.bf16.msra.mxu0 0
    %265 = vmatprep.subr.bf16.mxu0 0
    %266 = vmatpush1.bf16.msra.mxu0 0
    %267 = vmatprep.subr.bf16.mxu0 0
    %268 = vmatpush1.bf16.msra.mxu0 0
    %269 = vmatprep.subr.bf16.mxu0 0
    %270 = vmatpush1.bf16.msra.mxu0 0
    %271 = vmatprep.subr.bf16.mxu0 0
    %272 = vmatpush1.bf16.msra.mxu0 0
    %273 = vmatprep.subr.bf16.mxu0 0
    %274 = vmatpush1.bf16.msra.mxu0 0
    %275 = vmatprep.mubr.bf16.mxu0 0
    %276 = vmatmul.mubr.bf16.gmra.mrb[0].mxu0 %v171
    %v277 = vpop.f32.mrb[0].mxu0
    %v278 = vadd.f32 %v193, %v277
    %v279 = vpop.f32.mrb[0].mxu0
    %v280 = vpop.f32.mrb[0].mxu0
    %v281 = vpop.f32.mrb[0].mxu0
    %282 = vdwg.mxu0
    %283 = vst [vmem:[#allocation8] sm:$0xff] %v278
    // Predicated region
    $region34: #{tpu_custom_call.1} parent=1 // pred_check
      _
    $region35: #{tpu_custom_call.1} parent=1 // pred_check_branch
      %285 = sbr.rel (0) target = $region37
    $region36: #{tpu_custom_call.1} parent=1 // pred_region
      %s287 = ssub.s32 128, 128
      %288 = vsyncadd [#allocation4], %s287
      %s290 = sshll.u32 [#allocation8], 4
      %s291 = int_to_ptr.vmem [resolvable:$true] %s290
      %293 = dma.vmem_to_hbm [thread:$0]  %s291, 128, %s5, [#allocation4]
    $region37: #{tpu_custom_call.1} parent=1 // pred_fallthru
      _
    // Predicated region
    $region38: #{tpu_custom_call.1} parent=1 // pred_check
      _
    $region39: #{tpu_custom_call.1} parent=1 // pred_check_branch
      %295 = sbr.rel (0) target = $region41
    $region40: #{tpu_custom_call.1} parent=1 // pred_region
      %296 = dma.done [#allocation4], 128
    $region41: #{tpu_custom_call.1} parent=1 // pred_fallthru
      _
    %297 = vsyncpa [#allocation3], 1
    %298 = vsyncpa [#allocation6], 1
    %299 = vsyncpa [#allocation4], 1

</llo_original>
